<compile_context>
chip_gen: v5e
topology: v5e:2x2
jax: 0.10.0
libtpu: 0.0.40
codegen_flags: <defaults>
</compile_context>

<pallas_src>
import functools

import jax
import jax.numpy as jnp
from jax.experimental import pallas as pl
from jax.experimental.pallas import tpu as pltpu

# ----------------------------- model config ---------------------------------
DIM = 32            # query_dim / dim
NUM_HEADS = 2       # num_attention_heads
HEAD_DIM = 16       # attention_head_dim
INNER_DIM = NUM_HEADS * HEAD_DIM   # 32
KV_INPUT_DIM = 48   # != DIM  -> kv_mapper exists
KV_BIAS = True      # kv_input_dim_proj_use_bias
EPS = 1e-6

B = 2
S_Q = 8
S_KV = 16


# ------------------------------- kernel -------------------------------------
def fused_block_kernel(h_ref, enc_ref, kv_w_ref, wqkv_ref, wo_ref, vecs_ref,
                       out_ref, *, num_heads, batch, s_q, s_kv):
    """kv_mapper + (RMSNorm -> cross-attn -> out proj -> residual) x 2, fused.

    h_ref    : (B*S,   D)   f32   batch-flattened hidden states
    enc_ref  : (B*Skv, Dkv) f32   batch-flattened encoder states
    kv_w_ref : (Dkv, D)     bf16  kv_mapper weight
    wqkv_ref : (D, 6*inner) bf16  [q1*scale | q2*scale | k1 | v1 | k2 | v2]
    wo_ref   : (2*inner, D) bf16  [o1 ; o2]
    vecs_ref : (8, D)       f32   rows: kv_b, gamma1, out_b1, gamma2, out_b2, pad
    """
    inner = wqkv_ref.shape[1] // 6
    dh = inner // num_heads
    bf16 = jnp.bfloat16
    f32 = jnp.float32

    kv_b = vecs_ref[0:1, :]
    g1 = vecs_ref[1:2, :]
    ob1 = vecs_ref[2:3, :]
    g2 = vecs_ref[3:4, :]
    ob2 = vecs_ref[4:5, :]

    wqkv = wqkv_ref[...]                     # (D, 6*inner) bf16
    wo = wo_ref[...]                         # (2*inner, D) bf16

    # ---- kv_mapper on the flattened encoder states: silu -> linear ----------
    x = enc_ref[...]                                             # (B*Skv, Dkv)
    x = x * jax.nn.sigmoid(x)                                    # silu, f32
    enc = jnp.dot(x.astype(bf16), kv_w_ref[...],
                  preferred_element_type=f32) + kv_b             # (B*Skv, D)
    enc_bf = enc.astype(bf16)

    # ---- all four K/V projections in a single lane-dense matmul -------------
    # columns of kv_all: [k1 | v1 | k2 | v2]
    kv_all = jnp.dot(enc_bf, wqkv[:, 2 * inner:],
                     preferred_element_type=f32)                 # (B*Skv, 4*inner)
    kv_bf = kv_all.astype(bf16)

    h = h_ref[...]                                               # (B*S, D) f32

    def attn_block(h_in, gamma, q_col0, kv_col0, wo_row0, ob):
        # RMSNorm (eps=1e-6), f32, on the batch-flattened rows.
        var = jnp.mean(h_in * h_in, axis=-1, keepdims=True)
        nh = h_in * jax.lax.rsqrt(var + EPS) * gamma
        # Q projection for all batches at once; 1/sqrt(dh) pre-folded into W.
        q = jnp.dot(nh.astype(bf16), wqkv[:, q_col0:q_col0 + inner],
                    preferred_element_type=f32)                  # (B*S, inner)
        q_bf = q.astype(bf16)

        # Per-(head, batch) score tiles, sublane-stacked (8-aligned offsets)
        # into one (H*B*S, Skv) array -> a single softmax pass.
        tiles = []
        for hd in range(num_heads):
            c0 = kv_col0 + hd * dh
            for b in range(batch):
                qh = q_bf[b * s_q:(b + 1) * s_q, hd * dh:(hd + 1) * dh]
                kh = kv_bf[b * s_kv:(b + 1) * s_kv, c0:c0 + dh]
                tiles.append(jax.lax.dot_general(
                    qh, kh, (((1,), (1,)), ((), ())),
                    preferred_element_type=f32))                 # (S, Skv)
        s = jnp.concatenate(tiles, axis=0)                       # (H*B*S, Skv)
        s = s - jnp.max(s, axis=-1, keepdims=True)
        p = jnp.exp(s)
        p = p * pl.reciprocal(jnp.sum(p, axis=-1, keepdims=True), approx=True)
        p_bf = p.astype(bf16)

        # Per-head context, sublane-stacked across batches -> one out-proj push
        # per head (accumulated per-head partials, no lane concat / transpose).
        acc = None
        for hd in range(num_heads):
            v0 = kv_col0 + inner + hd * dh
            ctx_tiles = []
            for b in range(batch):
                g = hd * batch + b
                pb = p_bf[g * s_q:(g + 1) * s_q, :]              # (S, Skv)
                vb = kv_bf[b * s_kv:(b + 1) * s_kv, v0:v0 + dh]  # (Skv, dh)
                ctx_tiles.append(jnp.dot(pb, vb, preferred_element_type=f32))
            ctx_h = jnp.concatenate(ctx_tiles, axis=0)           # (B*S, dh)
            part = jnp.dot(ctx_h.astype(bf16),
                           wo[wo_row0 + hd * dh:wo_row0 + (hd + 1) * dh, :],
                           preferred_element_type=f32)           # (B*S, D)
            acc = part if acc is None else acc + part
        return acc + ob + h_in                    # out-proj bias + residual

    h = attn_block(h, g1, 0, 0, 0, ob1)           # attn1: q1 / k1,v1 / o1
    h = attn_block(h, g2, inner, 2 * inner, inner, ob2)  # attn2: q2 / k2,v2 / o2
    out_ref[...] = h


# ------------------------------ wrapper --------------------------------------
def skip_ff_transformer_block(hidden_states, encoder_hidden_states, p):
    Bn, S, D = hidden_states.shape
    _, Skv, Dkv = encoder_hidden_states.shape
    inner = p["q1"].shape[1]
    dh = inner // NUM_HEADS
    scale = 1.0 / (dh ** 0.5)

    # Packed lane-dense weight tile: [q1*scale | q2*scale | k1 | v1 | k2 | v2].
    wqkv = jnp.concatenate(
        [p["q1"] * scale, p["q2"] * scale,
         p["k1"], p["v1"], p["k2"], p["v2"]], axis=1).astype(jnp.bfloat16)
    # Sublane-stacked out-projection weights: [o1 ; o2].
    wo = jnp.concatenate([p["o1"], p["o2"]], axis=0).astype(jnp.bfloat16)
    kv_w = p["kv_w"].astype(jnp.bfloat16)
    # All tiny per-channel vectors in one (8, D) f32 tile (single DMA).
    vecs = jnp.concatenate(
        [p["kv_b"], p["norm1_g"], p["ob1"], p["norm2_g"], p["ob2"],
         jnp.zeros((3, D), jnp.float32)], axis=0)

    # Flatten batch into the sublane (row) axis — free reshapes.
    h_flat = hidden_states.reshape(Bn * S, D)
    enc_flat = encoder_hidden_states.reshape(Bn * Skv, Dkv)

    kernel = functools.partial(fused_block_kernel, num_heads=NUM_HEADS,
                               batch=Bn, s_q=S, s_kv=Skv)

    def vm():
        return pl.BlockSpec(memory_space=pltpu.MemorySpace.VMEM)

    out_flat = pl.pallas_call(
        kernel,
        out_shape=jax.ShapeDtypeStruct((Bn * S, D), jnp.float32),
        in_specs=[vm(), vm(), vm(), vm(), vm(), vm()],
        out_specs=vm(),
    )(h_flat, enc_flat, kv_w, wqkv, wo, vecs)
    return out_flat.reshape(Bn, S, D)


# ------------------------- pure-JAX reference --------------------------------
def ref_forward(h, enc_in, p):
    enc = jax.nn.silu(enc_in) @ p["kv_w"] + p["kv_b"][0]

    def one_attn(h, gamma, wq, wk, wv, wo, bo):
        var = jnp.mean(h * h, axis=-1, keepdims=True)
        nh = h * jax.lax.rsqrt(var + EPS) * gamma[0]
        q = nh @ wq
        k = enc @ wk
        v = enc @ wv
        Bn, S, inner = q.shape
        dh = inner // NUM_HEADS
        q = q.reshape(Bn, S, NUM_HEADS, dh).transpose(0, 2, 1, 3)
        k = k.reshape(Bn, -1, NUM_HEADS, dh).transpose(0, 2, 1, 3)
        v = v.reshape(Bn, -1, NUM_HEADS, dh).transpose(0, 2, 1, 3)
        s = jnp.einsum("bhqd,bhkd->bhqk", q, k) / jnp.sqrt(dh)
        a = jax.nn.softmax(s, axis=-1)
        ctx = jnp.einsum("bhqk,bhkd->bhqd", a, v)
        ctx = ctx.transpose(0, 2, 1, 3).reshape(Bn, S, inner)
        return ctx @ wo + bo[0] + h

    h = one_attn(h, p["norm1_g"], p["q1"], p["k1"], p["v1"], p["o1"], p["ob1"])
    h = one_attn(h, p["norm2_g"], p["q2"], p["k2"], p["v2"], p["o2"], p["ob2"])
    return h


# ------------------------------- params --------------------------------------
def make_params(key):
    ks = jax.random.split(key, 12)
    sc = 0.05
    p = {
        "kv_w": sc * jax.random.normal(ks[0], (KV_INPUT_DIM, DIM), jnp.float32),
        "kv_b": sc * jax.random.normal(ks[1], (1, DIM), jnp.float32) if KV_BIAS
                else jnp.zeros((1, DIM), jnp.float32),
        "norm1_g": jnp.ones((1, DIM), jnp.float32),
        "norm2_g": jnp.ones((1, DIM), jnp.float32),
        "q1": sc * jax.random.normal(ks[2], (DIM, INNER_DIM), jnp.float32),
        "k1": sc * jax.random.normal(ks[3], (DIM, INNER_DIM), jnp.float32),
        "v1": sc * jax.random.normal(ks[4], (DIM, INNER_DIM), jnp.float32),
        "o1": sc * jax.random.normal(ks[5], (INNER_DIM, DIM), jnp.float32),
        "ob1": sc * jax.random.normal(ks[6], (1, DIM), jnp.float32),
        "q2": sc * jax.random.normal(ks[7], (DIM, INNER_DIM), jnp.float32),
        "k2": sc * jax.random.normal(ks[8], (DIM, INNER_DIM), jnp.float32),
        "v2": sc * jax.random.normal(ks[9], (DIM, INNER_DIM), jnp.float32),
        "o2": sc * jax.random.normal(ks[10], (INNER_DIM, DIM), jnp.float32),
        "ob2": sc * jax.random.normal(ks[11], (1, DIM), jnp.float32),
    }
    return p


# --------------------------------- main ---------------------------------------
if __name__ == "__main__":
    key = jax.random.PRNGKey(0)
    k_h, k_e, k_p = jax.random.split(key, 3)

    hidden_states = jax.random.normal(k_h, (B, S_Q, DIM), jnp.float32)
    encoder_hidden_states = jax.random.normal(k_e, (B, S_KV, KV_INPUT_DIM), jnp.float32)
    params = make_params(k_p)

    out = skip_ff_transformer_block(hidden_states, encoder_hidden_states, params)
    out = jax.block_until_ready(out)

    ref = ref_forward(hidden_states, encoder_hidden_states, params)
    assert out.shape == (B, S_Q, DIM)
    # Tolerance covers bf16 MXU operands (f32 accumulation) and the EUP
    # approximate reciprocal in the softmax denominator; RMSNorm/silu/softmax
    # math stays f32 so the error is well inside this bound.
    max_diff = jnp.max(jnp.abs(out - ref))
    assert jnp.allclose(out, ref, atol=2e-2, rtol=2e-2), \
        f"mismatch: max abs diff {max_diff}"

    print("KERNEL_OK")
</pallas_src>

<mosaic_0001>
module attributes {stable_mosaic.version = 11 : i64} {
  func.func @fused_block_kernel(%arg0: memref<16x32xf32, #tpu.memory_space<vmem>>, %arg1: memref<32x48xf32, #tpu.memory_space<vmem>>, %arg2: memref<48x32xbf16, #tpu.memory_space<vmem>>, %arg3: memref<32x192xbf16, #tpu.memory_space<vmem>>, %arg4: memref<64x32xbf16, #tpu.memory_space<vmem>>, %arg5: memref<8x32xf32, #tpu.memory_space<vmem>>, %arg6: memref<16x32xf32, #tpu.memory_space<vmem>>) attributes {dimension_semantics = [], scalar_prefetch = 0 : i64, scratch_operands = 0 : i64, tpu.core_type = #tpu.core_type<tc>} {
    %c0 = arith.constant 0 : index
    %c0_0 = arith.constant 0 : index
    %0 = vector.load %arg5[%c0, %c0_0] : memref<8x32xf32, #tpu.memory_space<vmem>>, vector<1x32xf32>
    %c1 = arith.constant 1 : index
    %c0_1 = arith.constant 0 : index
    %1 = vector.load %arg5[%c1, %c0_1] : memref<8x32xf32, #tpu.memory_space<vmem>>, vector<1x32xf32>
    %c2 = arith.constant 2 : index
    %c0_2 = arith.constant 0 : index
    %2 = vector.load %arg5[%c2, %c0_2] : memref<8x32xf32, #tpu.memory_space<vmem>>, vector<1x32xf32>
    %c3 = arith.constant 3 : index
    %c0_3 = arith.constant 0 : index
    %3 = vector.load %arg5[%c3, %c0_3] : memref<8x32xf32, #tpu.memory_space<vmem>>, vector<1x32xf32>
    %c4 = arith.constant 4 : index
    %c0_4 = arith.constant 0 : index
    %4 = vector.load %arg5[%c4, %c0_4] : memref<8x32xf32, #tpu.memory_space<vmem>>, vector<1x32xf32>
    %c0_5 = arith.constant 0 : index
    %c0_6 = arith.constant 0 : index
    %5 = vector.load %arg3[%c0_5, %c0_6] : memref<32x192xbf16, #tpu.memory_space<vmem>>, vector<32x192xbf16>
    %c0_7 = arith.constant 0 : index
    %c0_8 = arith.constant 0 : index
    %6 = vector.load %arg4[%c0_7, %c0_8] : memref<64x32xbf16, #tpu.memory_space<vmem>>, vector<64x32xbf16>
    %c0_9 = arith.constant 0 : index
    %c0_10 = arith.constant 0 : index
    %7 = vector.load %arg1[%c0_9, %c0_10] : memref<32x48xf32, #tpu.memory_space<vmem>>, vector<32x48xf32>
    %8 = arith.negf %7 : vector<32x48xf32>
    %9 = math.exp %8 : vector<32x48xf32>
    %cst = arith.constant 1.000000e+00 : f32
    %10 = vector.broadcast %cst : f32 to vector<32x48xf32>
    %11 = arith.addf %10, %9 : vector<32x48xf32>
    %12 = arith.divf %10, %11 : vector<32x48xf32>
    %13 = arith.mulf %7, %12 : vector<32x48xf32>
    %14 = arith.truncf %13 : vector<32x48xf32> to vector<32x48xbf16>
    %c0_11 = arith.constant 0 : index
    %c0_12 = arith.constant 0 : index
    %15 = vector.load %arg2[%c0_11, %c0_12] : memref<48x32xbf16, #tpu.memory_space<vmem>>, vector<48x32xbf16>
    %cst_13 = arith.constant dense<0.000000e+00> : vector<32x32xf32>
    %16 = tpu.matmul %14, %15, %cst_13 {dimension_numbers = #tpu.dot_dimension_numbers<[1], [0], [0], [1], [0, 0, 1, 1], [], []>} : vector<32x48xbf16>, vector<48x32xbf16>, vector<32x32xf32> -> vector<32x32xf32>
    %17 = vector.broadcast %0 : vector<1x32xf32> to vector<32x32xf32>
    %18 = arith.addf %16, %17 : vector<32x32xf32>
    %19 = arith.truncf %18 : vector<32x32xf32> to vector<32x32xbf16>
    %20 = vector.extract_strided_slice %5 {offsets = [0, 64], sizes = [32, 128], strides = [1, 1]} : vector<32x192xbf16> to vector<32x128xbf16>
    %cst_14 = arith.constant dense<0.000000e+00> : vector<32x128xf32>
    %21 = tpu.matmul %19, %20, %cst_14 {dimension_numbers = #tpu.dot_dimension_numbers<[1], [0], [0], [1], [0, 0, 1, 1], [], []>} : vector<32x32xbf16>, vector<32x128xbf16>, vector<32x128xf32> -> vector<32x128xf32>
    %22 = arith.truncf %21 : vector<32x128xf32> to vector<32x128xbf16>
    %c0_15 = arith.constant 0 : index
    %c0_16 = arith.constant 0 : index
    %23 = vector.load %arg0[%c0_15, %c0_16] : memref<16x32xf32, #tpu.memory_space<vmem>>, vector<16x32xf32>
    %24 = arith.mulf %23, %23 : vector<16x32xf32>
    %cst_17 = arith.constant dense<0.000000e+00> : vector<16xf32>
    %25 = vector.multi_reduction <add>, %24, %cst_17 [1] : vector<16x32xf32> to vector<16xf32>
    %26 = vector.shape_cast %25 : vector<16xf32> to vector<16x1xf32>
    %cst_18 = arith.constant 3.200000e+01 : f32
    %27 = vector.broadcast %cst_18 : f32 to vector<16x1xf32>
    %28 = arith.divf %26, %27 : vector<16x1xf32>
    %cst_19 = arith.constant 9.99999997E-7 : f32
    %29 = vector.broadcast %cst_19 : f32 to vector<16x1xf32>
    %30 = arith.addf %28, %29 : vector<16x1xf32>
    %31 = math.rsqrt %30 : vector<16x1xf32>
    %32 = vector.broadcast %31 : vector<16x1xf32> to vector<16x32xf32>
    %33 = arith.mulf %23, %32 : vector<16x32xf32>
    %34 = vector.broadcast %1 : vector<1x32xf32> to vector<16x32xf32>
    %35 = arith.mulf %33, %34 : vector<16x32xf32>
    %36 = arith.truncf %35 : vector<16x32xf32> to vector<16x32xbf16>
    %37 = vector.extract_strided_slice %5 {offsets = [0, 0], sizes = [32, 32], strides = [1, 1]} : vector<32x192xbf16> to vector<32x32xbf16>
    %cst_20 = arith.constant dense<0.000000e+00> : vector<16x32xf32>
    %38 = tpu.matmul %36, %37, %cst_20 {dimension_numbers = #tpu.dot_dimension_numbers<[1], [0], [0], [1], [0, 0, 1, 1], [], []>} : vector<16x32xbf16>, vector<32x32xbf16>, vector<16x32xf32> -> vector<16x32xf32>
    %39 = arith.truncf %38 : vector<16x32xf32> to vector<16x32xbf16>
    %40 = vector.extract_strided_slice %39 {offsets = [0, 0], sizes = [8, 16], strides = [1, 1]} : vector<16x32xbf16> to vector<8x16xbf16>
    %41 = vector.extract_strided_slice %22 {offsets = [0, 0], sizes = [16, 16], strides = [1, 1]} : vector<32x128xbf16> to vector<16x16xbf16>
    %cst_21 = arith.constant dense<0.000000e+00> : vector<8x16xf32>
    %42 = tpu.matmul %40, %41, %cst_21 {dimension_numbers = #tpu.dot_dimension_numbers<[1], [1], [0], [0], [0, 0, 1, 0], [], []>} : vector<8x16xbf16>, vector<16x16xbf16>, vector<8x16xf32> -> vector<8x16xf32>
    %43 = vector.extract_strided_slice %39 {offsets = [8, 0], sizes = [8, 16], strides = [1, 1]} : vector<16x32xbf16> to vector<8x16xbf16>
    %44 = vector.extract_strided_slice %22 {offsets = [16, 0], sizes = [16, 16], strides = [1, 1]} : vector<32x128xbf16> to vector<16x16xbf16>
    %cst_22 = arith.constant dense<0.000000e+00> : vector<8x16xf32>
    %45 = tpu.matmul %43, %44, %cst_22 {dimension_numbers = #tpu.dot_dimension_numbers<[1], [1], [0], [0], [0, 0, 1, 0], [], []>} : vector<8x16xbf16>, vector<16x16xbf16>, vector<8x16xf32> -> vector<8x16xf32>
    %46 = vector.extract_strided_slice %39 {offsets = [0, 16], sizes = [8, 16], strides = [1, 1]} : vector<16x32xbf16> to vector<8x16xbf16>
    %47 = vector.extract_strided_slice %22 {offsets = [0, 16], sizes = [16, 16], strides = [1, 1]} : vector<32x128xbf16> to vector<16x16xbf16>
    %cst_23 = arith.constant dense<0.000000e+00> : vector<8x16xf32>
    %48 = tpu.matmul %46, %47, %cst_23 {dimension_numbers = #tpu.dot_dimension_numbers<[1], [1], [0], [0], [0, 0, 1, 0], [], []>} : vector<8x16xbf16>, vector<16x16xbf16>, vector<8x16xf32> -> vector<8x16xf32>
    %49 = vector.extract_strided_slice %39 {offsets = [8, 16], sizes = [8, 16], strides = [1, 1]} : vector<16x32xbf16> to vector<8x16xbf16>
    %50 = vector.extract_strided_slice %22 {offsets = [16, 16], sizes = [16, 16], strides = [1, 1]} : vector<32x128xbf16> to vector<16x16xbf16>
    %cst_24 = arith.constant dense<0.000000e+00> : vector<8x16xf32>
    %51 = tpu.matmul %49, %50, %cst_24 {dimension_numbers = #tpu.dot_dimension_numbers<[1], [1], [0], [0], [0, 0, 1, 0], [], []>} : vector<8x16xbf16>, vector<16x16xbf16>, vector<8x16xf32> -> vector<8x16xf32>
    %52 = tpu.concatenate %42, %45, %48, %51 in 0 : vector<8x16xf32>, vector<8x16xf32>, vector<8x16xf32>, vector<8x16xf32> -> vector<32x16xf32>
    %cst_25 = arith.constant dense<0xFF800000> : vector<32xf32>
    %53 = vector.multi_reduction <maximumf>, %52, %cst_25 [1] : vector<32x16xf32> to vector<32xf32>
    %54 = vector.shape_cast %53 : vector<32xf32> to vector<32x1xf32>
    %55 = vector.broadcast %54 : vector<32x1xf32> to vector<32x16xf32>
    %56 = arith.subf %52, %55 : vector<32x16xf32>
    %57 = math.exp %56 : vector<32x16xf32>
    %cst_26 = arith.constant dense<0.000000e+00> : vector<32xf32>
    %58 = vector.multi_reduction <add>, %57, %cst_26 [1] : vector<32x16xf32> to vector<32xf32>
    %59 = vector.shape_cast %58 : vector<32xf32> to vector<32x1xf32>
    %60 = tpu.reciprocal %59 {approx = true} : vector<32x1xf32> -> vector<32x1xf32>
    %61 = vector.broadcast %60 : vector<32x1xf32> to vector<32x16xf32>
    %62 = arith.mulf %57, %61 : vector<32x16xf32>
    %63 = arith.truncf %62 : vector<32x16xf32> to vector<32x16xbf16>
    %64 = vector.extract_strided_slice %63 {offsets = [0, 0], sizes = [8, 16], strides = [1, 1]} : vector<32x16xbf16> to vector<8x16xbf16>
    %65 = vector.extract_strided_slice %22 {offsets = [0, 32], sizes = [16, 16], strides = [1, 1]} : vector<32x128xbf16> to vector<16x16xbf16>
    %cst_27 = arith.constant dense<0.000000e+00> : vector<8x16xf32>
    %66 = tpu.matmul %64, %65, %cst_27 {dimension_numbers = #tpu.dot_dimension_numbers<[1], [0], [0], [1], [0, 0, 1, 1], [], []>} : vector<8x16xbf16>, vector<16x16xbf16>, vector<8x16xf32> -> vector<8x16xf32>
    %67 = vector.extract_strided_slice %63 {offsets = [8, 0], sizes = [8, 16], strides = [1, 1]} : vector<32x16xbf16> to vector<8x16xbf16>
    %68 = vector.extract_strided_slice %22 {offsets = [16, 32], sizes = [16, 16], strides = [1, 1]} : vector<32x128xbf16> to vector<16x16xbf16>
    %cst_28 = arith.constant dense<0.000000e+00> : vector<8x16xf32>
    %69 = tpu.matmul %67, %68, %cst_28 {dimension_numbers = #tpu.dot_dimension_numbers<[1], [0], [0], [1], [0, 0, 1, 1], [], []>} : vector<8x16xbf16>, vector<16x16xbf16>, vector<8x16xf32> -> vector<8x16xf32>
    %70 = tpu.concatenate %66, %69 in 0 : vector<8x16xf32>, vector<8x16xf32> -> vector<16x16xf32>
    %71 = arith.truncf %70 : vector<16x16xf32> to vector<16x16xbf16>
    %72 = vector.extract_strided_slice %6 {offsets = [0, 0], sizes = [16, 32], strides = [1, 1]} : vector<64x32xbf16> to vector<16x32xbf16>
    %cst_29 = arith.constant dense<0.000000e+00> : vector<16x32xf32>
    %73 = tpu.matmul %71, %72, %cst_29 {dimension_numbers = #tpu.dot_dimension_numbers<[1], [0], [0], [1], [0, 0, 1, 1], [], []>} : vector<16x16xbf16>, vector<16x32xbf16>, vector<16x32xf32> -> vector<16x32xf32>
    %74 = vector.extract_strided_slice %63 {offsets = [16, 0], sizes = [8, 16], strides = [1, 1]} : vector<32x16xbf16> to vector<8x16xbf16>
    %75 = vector.extract_strided_slice %22 {offsets = [0, 48], sizes = [16, 16], strides = [1, 1]} : vector<32x128xbf16> to vector<16x16xbf16>
    %cst_30 = arith.constant dense<0.000000e+00> : vector<8x16xf32>
    %76 = tpu.matmul %74, %75, %cst_30 {dimension_numbers = #tpu.dot_dimension_numbers<[1], [0], [0], [1], [0, 0, 1, 1], [], []>} : vector<8x16xbf16>, vector<16x16xbf16>, vector<8x16xf32> -> vector<8x16xf32>
    %77 = vector.extract_strided_slice %63 {offsets = [24, 0], sizes = [8, 16], strides = [1, 1]} : vector<32x16xbf16> to vector<8x16xbf16>
    %78 = vector.extract_strided_slice %22 {offsets = [16, 48], sizes = [16, 16], strides = [1, 1]} : vector<32x128xbf16> to vector<16x16xbf16>
    %cst_31 = arith.constant dense<0.000000e+00> : vector<8x16xf32>
    %79 = tpu.matmul %77, %78, %cst_31 {dimension_numbers = #tpu.dot_dimension_numbers<[1], [0], [0], [1], [0, 0, 1, 1], [], []>} : vector<8x16xbf16>, vector<16x16xbf16>, vector<8x16xf32> -> vector<8x16xf32>
    %80 = tpu.concatenate %76, %79 in 0 : vector<8x16xf32>, vector<8x16xf32> -> vector<16x16xf32>
    %81 = arith.truncf %80 : vector<16x16xf32> to vector<16x16xbf16>
    %82 = vector.extract_strided_slice %6 {offsets = [16, 0], sizes = [16, 32], strides = [1, 1]} : vector<64x32xbf16> to vector<16x32xbf16>
    %cst_32 = arith.constant dense<0.000000e+00> : vector<16x32xf32>
    %83 = tpu.matmul %81, %82, %cst_32 {dimension_numbers = #tpu.dot_dimension_numbers<[1], [0], [0], [1], [0, 0, 1, 1], [], []>} : vector<16x16xbf16>, vector<16x32xbf16>, vector<16x32xf32> -> vector<16x32xf32>
    %84 = arith.addf %73, %83 : vector<16x32xf32>
    %85 = vector.broadcast %2 : vector<1x32xf32> to vector<16x32xf32>
    %86 = arith.addf %84, %85 : vector<16x32xf32>
    %87 = arith.addf %86, %23 : vector<16x32xf32>
    %88 = arith.mulf %87, %87 : vector<16x32xf32>
    %cst_33 = arith.constant dense<0.000000e+00> : vector<16xf32>
    %89 = vector.multi_reduction <add>, %88, %cst_33 [1] : vector<16x32xf32> to vector<16xf32>
    %90 = vector.shape_cast %89 : vector<16xf32> to vector<16x1xf32>
    %cst_34 = arith.constant 3.200000e+01 : f32
    %91 = vector.broadcast %cst_34 : f32 to vector<16x1xf32>
    %92 = arith.divf %90, %91 : vector<16x1xf32>
    %cst_35 = arith.constant 9.99999997E-7 : f32
    %93 = vector.broadcast %cst_35 : f32 to vector<16x1xf32>
    %94 = arith.addf %92, %93 : vector<16x1xf32>
    %95 = math.rsqrt %94 : vector<16x1xf32>
    %96 = vector.broadcast %95 : vector<16x1xf32> to vector<16x32xf32>
    %97 = arith.mulf %87, %96 : vector<16x32xf32>
    %98 = vector.broadcast %3 : vector<1x32xf32> to vector<16x32xf32>
    %99 = arith.mulf %97, %98 : vector<16x32xf32>
    %100 = arith.truncf %99 : vector<16x32xf32> to vector<16x32xbf16>
    %101 = vector.extract_strided_slice %5 {offsets = [0, 32], sizes = [32, 32], strides = [1, 1]} : vector<32x192xbf16> to vector<32x32xbf16>
    %cst_36 = arith.constant dense<0.000000e+00> : vector<16x32xf32>
    %102 = tpu.matmul %100, %101, %cst_36 {dimension_numbers = #tpu.dot_dimension_numbers<[1], [0], [0], [1], [0, 0, 1, 1], [], []>} : vector<16x32xbf16>, vector<32x32xbf16>, vector<16x32xf32> -> vector<16x32xf32>
    %103 = arith.truncf %102 : vector<16x32xf32> to vector<16x32xbf16>
    %104 = vector.extract_strided_slice %103 {offsets = [0, 0], sizes = [8, 16], strides = [1, 1]} : vector<16x32xbf16> to vector<8x16xbf16>
    %105 = vector.extract_strided_slice %22 {offsets = [0, 64], sizes = [16, 16], strides = [1, 1]} : vector<32x128xbf16> to vector<16x16xbf16>
    %cst_37 = arith.constant dense<0.000000e+00> : vector<8x16xf32>
    %106 = tpu.matmul %104, %105, %cst_37 {dimension_numbers = #tpu.dot_dimension_numbers<[1], [1], [0], [0], [0, 0, 1, 0], [], []>} : vector<8x16xbf16>, vector<16x16xbf16>, vector<8x16xf32> -> vector<8x16xf32>
    %107 = vector.extract_strided_slice %103 {offsets = [8, 0], sizes = [8, 16], strides = [1, 1]} : vector<16x32xbf16> to vector<8x16xbf16>
    %108 = vector.extract_strided_slice %22 {offsets = [16, 64], sizes = [16, 16], strides = [1, 1]} : vector<32x128xbf16> to vector<16x16xbf16>
    %cst_38 = arith.constant dense<0.000000e+00> : vector<8x16xf32>
    %109 = tpu.matmul %107, %108, %cst_38 {dimension_numbers = #tpu.dot_dimension_numbers<[1], [1], [0], [0], [0, 0, 1, 0], [], []>} : vector<8x16xbf16>, vector<16x16xbf16>, vector<8x16xf32> -> vector<8x16xf32>
    %110 = vector.extract_strided_slice %103 {offsets = [0, 16], sizes = [8, 16], strides = [1, 1]} : vector<16x32xbf16> to vector<8x16xbf16>
    %111 = vector.extract_strided_slice %22 {offsets = [0, 80], sizes = [16, 16], strides = [1, 1]} : vector<32x128xbf16> to vector<16x16xbf16>
    %cst_39 = arith.constant dense<0.000000e+00> : vector<8x16xf32>
    %112 = tpu.matmul %110, %111, %cst_39 {dimension_numbers = #tpu.dot_dimension_numbers<[1], [1], [0], [0], [0, 0, 1, 0], [], []>} : vector<8x16xbf16>, vector<16x16xbf16>, vector<8x16xf32> -> vector<8x16xf32>
    %113 = vector.extract_strided_slice %103 {offsets = [8, 16], sizes = [8, 16], strides = [1, 1]} : vector<16x32xbf16> to vector<8x16xbf16>
    %114 = vector.extract_strided_slice %22 {offsets = [16, 80], sizes = [16, 16], strides = [1, 1]} : vector<32x128xbf16> to vector<16x16xbf16>
    %cst_40 = arith.constant dense<0.000000e+00> : vector<8x16xf32>
    %115 = tpu.matmul %113, %114, %cst_40 {dimension_numbers = #tpu.dot_dimension_numbers<[1], [1], [0], [0], [0, 0, 1, 0], [], []>} : vector<8x16xbf16>, vector<16x16xbf16>, vector<8x16xf32> -> vector<8x16xf32>
    %116 = tpu.concatenate %106, %109, %112, %115 in 0 : vector<8x16xf32>, vector<8x16xf32>, vector<8x16xf32>, vector<8x16xf32> -> vector<32x16xf32>
    %cst_41 = arith.constant dense<0xFF800000> : vector<32xf32>
    %117 = vector.multi_reduction <maximumf>, %116, %cst_41 [1] : vector<32x16xf32> to vector<32xf32>
    %118 = vector.shape_cast %117 : vector<32xf32> to vector<32x1xf32>
    %119 = vector.broadcast %118 : vector<32x1xf32> to vector<32x16xf32>
    %120 = arith.subf %116, %119 : vector<32x16xf32>
    %121 = math.exp %120 : vector<32x16xf32>
    %cst_42 = arith.constant dense<0.000000e+00> : vector<32xf32>
    %122 = vector.multi_reduction <add>, %121, %cst_42 [1] : vector<32x16xf32> to vector<32xf32>
    %123 = vector.shape_cast %122 : vector<32xf32> to vector<32x1xf32>
    %124 = tpu.reciprocal %123 {approx = true} : vector<32x1xf32> -> vector<32x1xf32>
    %125 = vector.broadcast %124 : vector<32x1xf32> to vector<32x16xf32>
    %126 = arith.mulf %121, %125 : vector<32x16xf32>
    %127 = arith.truncf %126 : vector<32x16xf32> to vector<32x16xbf16>
    %128 = vector.extract_strided_slice %127 {offsets = [0, 0], sizes = [8, 16], strides = [1, 1]} : vector<32x16xbf16> to vector<8x16xbf16>
    %129 = vector.extract_strided_slice %22 {offsets = [0, 96], sizes = [16, 16], strides = [1, 1]} : vector<32x128xbf16> to vector<16x16xbf16>
    %cst_43 = arith.constant dense<0.000000e+00> : vector<8x16xf32>
    %130 = tpu.matmul %128, %129, %cst_43 {dimension_numbers = #tpu.dot_dimension_numbers<[1], [0], [0], [1], [0, 0, 1, 1], [], []>} : vector<8x16xbf16>, vector<16x16xbf16>, vector<8x16xf32> -> vector<8x16xf32>
    %131 = vector.extract_strided_slice %127 {offsets = [8, 0], sizes = [8, 16], strides = [1, 1]} : vector<32x16xbf16> to vector<8x16xbf16>
    %132 = vector.extract_strided_slice %22 {offsets = [16, 96], sizes = [16, 16], strides = [1, 1]} : vector<32x128xbf16> to vector<16x16xbf16>
    %cst_44 = arith.constant dense<0.000000e+00> : vector<8x16xf32>
    %133 = tpu.matmul %131, %132, %cst_44 {dimension_numbers = #tpu.dot_dimension_numbers<[1], [0], [0], [1], [0, 0, 1, 1], [], []>} : vector<8x16xbf16>, vector<16x16xbf16>, vector<8x16xf32> -> vector<8x16xf32>
    %134 = tpu.concatenate %130, %133 in 0 : vector<8x16xf32>, vector<8x16xf32> -> vector<16x16xf32>
    %135 = arith.truncf %134 : vector<16x16xf32> to vector<16x16xbf16>
    %136 = vector.extract_strided_slice %6 {offsets = [32, 0], sizes = [16, 32], strides = [1, 1]} : vector<64x32xbf16> to vector<16x32xbf16>
    %cst_45 = arith.constant dense<0.000000e+00> : vector<16x32xf32>
    %137 = tpu.matmul %135, %136, %cst_45 {dimension_numbers = #tpu.dot_dimension_numbers<[1], [0], [0], [1], [0, 0, 1, 1], [], []>} : vector<16x16xbf16>, vector<16x32xbf16>, vector<16x32xf32> -> vector<16x32xf32>
    %138 = vector.extract_strided_slice %127 {offsets = [16, 0], sizes = [8, 16], strides = [1, 1]} : vector<32x16xbf16> to vector<8x16xbf16>
    %139 = vector.extract_strided_slice %22 {offsets = [0, 112], sizes = [16, 16], strides = [1, 1]} : vector<32x128xbf16> to vector<16x16xbf16>
    %cst_46 = arith.constant dense<0.000000e+00> : vector<8x16xf32>
    %140 = tpu.matmul %138, %139, %cst_46 {dimension_numbers = #tpu.dot_dimension_numbers<[1], [0], [0], [1], [0, 0, 1, 1], [], []>} : vector<8x16xbf16>, vector<16x16xbf16>, vector<8x16xf32> -> vector<8x16xf32>
    %141 = vector.extract_strided_slice %127 {offsets = [24, 0], sizes = [8, 16], strides = [1, 1]} : vector<32x16xbf16> to vector<8x16xbf16>
    %142 = vector.extract_strided_slice %22 {offsets = [16, 112], sizes = [16, 16], strides = [1, 1]} : vector<32x128xbf16> to vector<16x16xbf16>
    %cst_47 = arith.constant dense<0.000000e+00> : vector<8x16xf32>
    %143 = tpu.matmul %141, %142, %cst_47 {dimension_numbers = #tpu.dot_dimension_numbers<[1], [0], [0], [1], [0, 0, 1, 1], [], []>} : vector<8x16xbf16>, vector<16x16xbf16>, vector<8x16xf32> -> vector<8x16xf32>
    %144 = tpu.concatenate %140, %143 in 0 : vector<8x16xf32>, vector<8x16xf32> -> vector<16x16xf32>
    %145 = arith.truncf %144 : vector<16x16xf32> to vector<16x16xbf16>
    %146 = vector.extract_strided_slice %6 {offsets = [48, 0], sizes = [16, 32], strides = [1, 1]} : vector<64x32xbf16> to vector<16x32xbf16>
    %cst_48 = arith.constant dense<0.000000e+00> : vector<16x32xf32>
    %147 = tpu.matmul %145, %146, %cst_48 {dimension_numbers = #tpu.dot_dimension_numbers<[1], [0], [0], [1], [0, 0, 1, 1], [], []>} : vector<16x16xbf16>, vector<16x32xbf16>, vector<16x32xf32> -> vector<16x32xf32>
    %148 = arith.addf %137, %147 : vector<16x32xf32>
    %149 = vector.broadcast %4 : vector<1x32xf32> to vector<16x32xf32>
    %150 = arith.addf %148, %149 : vector<16x32xf32>
    %151 = arith.addf %150, %87 : vector<16x32xf32>
    %c0_49 = arith.constant 0 : index
    %c0_50 = arith.constant 0 : index
    %152 = vector.load %arg6[%c0_49, %c0_50] : memref<16x32xf32, #tpu.memory_space<vmem>>, vector<16x32xf32>
    tpu.vector_store %arg6[%c0_49, %c0_50], %151 {strides = array<i32>} : memref<16x32xf32, #tpu.memory_space<vmem>>, vector<16x32xf32>,
    return
  }
}

</mosaic_0001>

<llo_original>
// kernel: tpu_custom_call.1
$region0: #{tpu_custom_call.1}
  #allocation0 [shape = 'u32[]', space=smem, size = 0x4, offset = 0x4, fixed_abs, tag = 'smem constant byte address 0x4 - core index']
  #allocation1 [shape = 'u32[72,128]{1,0:T(1,128)}', space=vmem, size = 0x9000, scoped, tag = 'internal scratch']
  %s0 = inlined_call_operand.hbm [shape: f32[16,32], index: 0, kind: input, shape index: {}]
  %s1 = inlined_call_operand.vmem [shape: f32[32,48], index: 1, kind: input, shape index: {}]
  %s2 = inlined_call_operand.vmem [shape: bf16[48,32], index: 2, kind: input, shape index: {}]
  %s3 = inlined_call_operand.vmem [shape: bf16[32,192], index: 3, kind: input, shape index: {}]
  %s4 = inlined_call_operand.vmem [shape: bf16[64,32], index: 4, kind: input, shape index: {}]
  %s5 = inlined_call_operand.vmem [shape: f32[8,32], index: 5, kind: input, shape index: {}]
  %s6 = inlined_call_operand.hbm [shape: f32[16,32], index: 6, kind: output, shape index: {}]
  %s7 = sld [smem:[#allocation0]]
  $region38: #{tpu_custom_call.1} parent=0
    _
  %s9 = ssub.s32 1, %s7
  %s10 = scalar_select 0, %s9, %s7
  $region1: #{tpu_custom_call.1} parent=0
    #allocation2 [shape = 'u8[8192]{0}', space=vmem, size = 0x2000, scoped, tag = 'input window, operand 0, single buffered']
    #allocation3 [shape = 's32[1]{0}', space=sflag, size = 0x4, scoped, tag = 'scoped memory for tpu_custom_call.1']
    #allocation4 [shape = 's32[1]{0}', space=sflag, size = 0x4, scoped, tag = 'scoped memory for tpu_custom_call.1']
    #allocation5 [shape = 'u8[8192]{0}', space=vmem, size = 0x2000, scoped, tag = 'output window, operand 0, single buffered']
    %11 = vsyncpa [#allocation3], 0
    %12 = vsyncpa [#allocation4], 0
    // Predicated region
    $region2: #{tpu_custom_call.1} parent=1 // pred_check
      _
    $region3: #{tpu_custom_call.1} parent=1 // pred_check_branch
      %14 = sbr.rel (0) target = $region5
    $region4: #{tpu_custom_call.1} parent=1 // pred_region
      %16 = vsyncadd [#allocation3], 0
      %s17 = sshll.u32 %s0, 4
      %s18 = int_to_ptr.hbm [resolvable:$true] %s17
      %s19 = sshll.u32 [#allocation2], 4
      %s20 = int_to_ptr.vmem [resolvable:$true] %s19
      %25 = dma.hbm_to_vmem [thread:$0]  %s18, 256, %s20, [#allocation3], 128, 128, 8
    $region5: #{tpu_custom_call.1} parent=1 // pred_fallthru
      _
    // Predicated region
    $region6: #{tpu_custom_call.1} parent=1 // pred_check
      _
    $region7: #{tpu_custom_call.1} parent=1 // pred_check_branch
      %27 = sbr.rel (0) target = $region9
    $region8: #{tpu_custom_call.1} parent=1 // pred_region
      _
    $region9: #{tpu_custom_call.1} parent=1 // pred_fallthru
      _
    // Predicated region
    $region10: #{tpu_custom_call.1} parent=1 // pred_check
      _
    $region11: #{tpu_custom_call.1} parent=1 // pred_check_branch
      %29 = sbr.rel (0) target = $region13
    $region12: #{tpu_custom_call.1} parent=1 // pred_region
      _
    $region13: #{tpu_custom_call.1} parent=1 // pred_fallthru
      _
    // Predicated region
    $region14: #{tpu_custom_call.1} parent=1 // pred_check
      _
    $region15: #{tpu_custom_call.1} parent=1 // pred_check_branch
      %31 = sbr.rel (0) target = $region17
    $region16: #{tpu_custom_call.1} parent=1 // pred_region
      _
    $region17: #{tpu_custom_call.1} parent=1 // pred_fallthru
      _
    // Predicated region
    $region18: #{tpu_custom_call.1} parent=1 // pred_check
      _
    $region19: #{tpu_custom_call.1} parent=1 // pred_check_branch
      %33 = sbr.rel (0) target = $region21
    $region20: #{tpu_custom_call.1} parent=1 // pred_region
      _
    $region21: #{tpu_custom_call.1} parent=1 // pred_fallthru
      _
    // Predicated region
    $region22: #{tpu_custom_call.1} parent=1 // pred_check
      _
    $region23: #{tpu_custom_call.1} parent=1 // pred_check_branch
      %35 = sbr.rel (0) target = $region25
    $region24: #{tpu_custom_call.1} parent=1 // pred_region
      _
    $region25: #{tpu_custom_call.1} parent=1 // pred_fallthru
      _
    // Predicated region
    $region26: #{tpu_custom_call.1} parent=1 // pred_check
      _
    $region27: #{tpu_custom_call.1} parent=1 // pred_check_branch
      %37 = sbr.rel (0) target = $region29
    $region28: #{tpu_custom_call.1} parent=1 // pred_region
      %39 = dma.done [#allocation3], 256
    $region29: #{tpu_custom_call.1} parent=1 // pred_fallthru
      _
    %v41 = vld [vmem:[%s5] sm:$0x1]
    %v42 = vld [vmem:[%s5 + $0x1] sm:$0x1]
    %v43 = vld [vmem:[%s5 + $0x2] sm:$0x1]
    %v44 = vld [vmem:[%s5 + $0x3] sm:$0x1]
    %v45 = vld [vmem:[%s5 + $0x4] sm:$0x1]
    %v46 = vld [vmem:[%s3] sm:$0xff]
    %v47 = vld [vmem:[%s3 + $0x8] sm:$0xff]
    %v48 = vld [vmem:[%s3 + $0x10] sm:$0xff]
    %v49 = vld [vmem:[%s3 + $0x18] sm:$0xff]
    %v50 = vld [vmem:[%s4] sm:$0xf]
    %v51 = vld [vmem:[%s4 + $0x4] sm:$0xf]
    %v52 = vld [vmem:[%s4 + $0x8] sm:$0xf]
    %v53 = vld [vmem:[%s4 + $0xc] sm:$0xf]
    %v54 = vld [vmem:[%s4 + $0x10] sm:$0xf]
    %v55 = vld [vmem:[%s4 + $0x14] sm:$0xf]
    %v56 = vld [vmem:[%s4 + $0x18] sm:$0xf]
    %v57 = vld [vmem:[%s4 + $0x1c] sm:$0xf]
    %v58 = vld [vmem:[%s1] sm:$0xff]
    %v59 = vld [vmem:[%s1 + $0x8] sm:$0xff]
    %v60 = vld [vmem:[%s1 + $0x10] sm:$0xff]
    %v61 = vld [vmem:[%s1 + $0x18] sm:$0xff]
    %v62 = vxor.u32 %v58, 2147483648
    %v63 = vxor.u32 %v59, 2147483648
    %v64 = vxor.u32 %v60, 2147483648
    %v65 = vxor.u32 %v61, 2147483648
    %v66 = vmul.f32 %v62, 1.442695
    %v67 = vpow.pop %v66
    %v68 = vmul.f32 %v63, 1.442695
    %v69 = vpow.pop %v68
    %v70 = vmul.f32 %v64, 1.442695
    %v71 = vpow.pop %v70
    %v72 = vmul.f32 %v65, 1.442695
    %v73 = vpow.pop %v72
    %v74 = vadd.f32 %v67, 1.0
    %v75 = vadd.f32 %v69, 1.0
    %v76 = vadd.f32 %v71, 1.0
    %v77 = vadd.f32 %v73, 1.0
    %v78 = vrcp.pop %v74
    %v79 = vmul.f32 %v74, %v78
    %v80 = vsub.f32 1.0, %v79
    %v81 = vmul.f32 %v78, %v80
    %v82 = vadd.f32 %v78, %v81
    %vm83 = vweird.f32 %v74
    %vm84 = vweird.f32 %v78
    %vm85 = vmor %vm83, %vm84
    %v86 = vsel %vm85, %v78, %v82
    %v87 = vand.u32 2147483647, %v74
    %vm88 = vcmp.eq.f32.partialorder %v87, 8.507059e+37
    %v89 = vand.u32 %v74, 2147483648
    %v90 = vor.u32 1.1754944e-38, %v89
    %v91 = vsel %vm88, %v90, %v86
    %v92 = vmul.f32 1.0, %v91
    %v93 = vrcp.pop %v75
    %v94 = vmul.f32 %v75, %v93
    %v95 = vsub.f32 1.0, %v94
    %v96 = vmul.f32 %v93, %v95
    %v97 = vadd.f32 %v93, %v96
    %vm98 = vweird.f32 %v75
    %vm99 = vweird.f32 %v93
    %vm100 = vmor %vm98, %vm99
    %v101 = vsel %vm100, %v93, %v97
    %v102 = vand.u32 2147483647, %v75
    %vm103 = vcmp.eq.f32.partialorder %v102, 8.507059e+37
    %v104 = vand.u32 %v75, 2147483648
    %v105 = vor.u32 1.1754944e-38, %v104
    %v106 = vsel %vm103, %v105, %v101
    %v107 = vmul.f32 1.0, %v106
    %v108 = vrcp.pop %v76
    %v109 = vmul.f32 %v76, %v108
    %v110 = vsub.f32 1.0, %v109
    %v111 = vmul.f32 %v108, %v110
    %v112 = vadd.f32 %v108, %v111
    %vm113 = vweird.f32 %v76
    %vm114 = vweird.f32 %v108
    %vm115 = vmor %vm113, %vm114
    %v116 = vsel %vm115, %v108, %v112
    %v117 = vand.u32 2147483647, %v76
    %vm118 = vcmp.eq.f32.partialorder %v117, 8.507059e+37
    %v119 = vand.u32 %v76, 2147483648
    %v120 = vor.u32 1.1754944e-38, %v119
    %v121 = vsel %vm118, %v120, %v116
    %v122 = vmul.f32 1.0, %v121
    %v123 = vrcp.pop %v77
    %v124 = vmul.f32 %v77, %v123
    %v125 = vsub.f32 1.0, %v124
    %v126 = vmul.f32 %v123, %v125
    %v127 = vadd.f32 %v123, %v126
    %vm128 = vweird.f32 %v77
    %vm129 = vweird.f32 %v123
    %vm130 = vmor %vm128, %vm129
    %v131 = vsel %vm130, %v123, %v127
    %v132 = vand.u32 2147483647, %v77
    %vm133 = vcmp.eq.f32.partialorder %v132, 8.507059e+37
    %v134 = vand.u32 %v77, 2147483648
    %v135 = vor.u32 1.1754944e-38, %v134
    %v136 = vsel %vm133, %v135, %v131
    %v137 = vmul.f32 1.0, %v136
    %v138 = vmul.f32 %v58, %v92
    %v139 = vmul.f32 %v59, %v107
    %v140 = vmul.f32 %v60, %v122
    %v141 = vmul.f32 %v61, %v137
    %v142 = vpack.c.bf16 %v139, %v138
    %v143 = vpack.c.bf16 %v141, %v140
    %v144 = vld [vmem:[%s2] sm:$0xf]
    %v145 = vld [vmem:[%s2 + $0x4] sm:$0xf]
    %v146 = vld [vmem:[%s2 + $0x8] sm:$0xf]
    %v147 = vld [vmem:[%s2 + $0xc] sm:$0xf]
    %v148 = vld [vmem:[%s2 + $0x10] sm:$0xf]
    %v149 = vld [vmem:[%s2 + $0x14] sm:$0xf]
    %v150 = vperm.slane %v41, 0
    %v157 = vunpack.c.l.b16 %v144
    %v158 = vunpack.c.l.b16 %v145
    %v159 = vunpack.c.l.b16 %v146
    %v160 = vunpack.c.l.b16 %v147
    %v161 = vunpack.c.l.b16 %v148
    %v162 = vunpack.c.l.b16 %v149
    %v163 = vpack.c.b16 %v158, %v157
    %v164 = vpack.c.b16 %v160, %v159
    %v165 = vpack.c.b16 %v162, %v161
    %vm169 = vcmask 392192
    %v171 = vsel %vm169, %v142, 0
    %v174 = vsel %vm169, %v143, 0
    %176 = vmatpush.bf16.msra.mxu0 0
    %177 = vmatpush.bf16.msra.mxu0 0
    %178 = vmatpush.bf16.msra.mxu0 0
    %179 = vmatpush.bf16.msra.mxu0 0
    %180 = vmatpush.bf16.msra.mxu0 0
    %181 = vmatpush.bf16.msra.mxu0 %v165
    %182 = vmatpush.bf16.msra.mxu0 %v164
    %183 = vmatpush.bf16.msra.mxu0 %v163
    %184 = vmatmul.bf16.gmra.mxu0 %v171
    %v185 = vpop.f32.mrf.mxu0
    %v186 = vadd.f32 %v150, %v185
    %v187 = vpop.f32.mrf.mxu0
    %v188 = vadd.f32 %v150, %v187
    %189 = vmatmul.bf16.gmra.mxu0 %v174
    %v190 = vpop.f32.mrf.mxu0
    %v191 = vadd.f32 %v150, %v190
    %v192 = vpop.f32.mrf.mxu0
    %v193 = vadd.f32 %v150, %v192
    %194 = vdwg.mxu0
    %v195 = vpack.c.bf16 %v188, %v186
    %v196 = vpack.c.bf16 %v193, %v191
    %v201 = vunpack.c.l.b16 %v46
    %v202 = vunpack.c.h.b16 %v46
    %v203 = vunpack.c.l.b16 %v47
    %v204 = vunpack.c.h.b16 %v47
    %v205 = vunpack.c.l.b16 %v48
    %v206 = vunpack.c.h.b16 %v48
    %v207 = vunpack.c.l.b16 %v49
    %v208 = vunpack.c.h.b16 %v49
    %v209 = vpack.c.b16 %v203, %v201
    %v210 = vpack.c.b16 %v204, %v202
    %v211 = vpack.c.b16 %v207, %v205
    %v212 = vpack.c.b16 %v208, %v206
    %213 = vrot.lane.b32.xlu0 %v209, 64
    %v214 = vpop.permute.xlu0 %213
    %215 = vrot.lane.b32.xlu0 %v210, 64
    %v216 = vpop.permute.xlu0 %215
    %217 = vrot.lane.b32.xlu0 %v211, 64
    %v218 = vpop.permute.xlu0 %217
    %219 = vrot.lane.b32.xlu0 %v212, 64
    %v220 = vpop.permute.xlu0 %219
    %vm221 = vcmask 523264
    %v222 = vsel %vm221, %v214, %v216
    %v223 = vsel %vm221, %v218, %v220
    %vm226 = vcmask 261120
    %v228 = vsel %vm226, %v195, 0
    %v231 = vsel %vm226, %v196, 0
    %233 = vmatpush.bf16.msra.mxu0 0
    %234 = vmatpush.bf16.msra.mxu0 0
    %235 = vmatpush.bf16.msra.mxu0 0
    %236 = vmatpush.bf16.msra.mxu0 0
    %237 = vmatpush.bf16.msra.mxu0 0
    %238 = vmatpush.bf16.msra.mxu0 0
    %239 = vmatpush.bf16.msra.mxu0 %v223
    %240 = vmatpush.bf16.msra.mxu0 %v222
    %241 = vmatmul.bf16.gmra.mxu0 %v228
    %v242 = vpop.f32.mrf.mxu0
    %v243 = vadd.f32 0.0, %v242
    %v244 = vpop.f32.mrf.mxu0
    %v245 = vadd.f32 0.0, %v244
    %246 = vmatmul.bf16.gmra.mxu0 %v231
    %v247 = vpop.f32.mrf.mxu0
    %v248 = vadd.f32 0.0, %v247
    %v249 = vpop.f32.mrf.mxu0
    %v250 = vadd.f32 0.0, %v249
    %251 = vdwg.mxu0
    %v252 = vpack.c.bf16 %v243, %v243
    %v253 = vpack.c.bf16 %v245, %v245
    %v254 = vpack.c.bf16 %v248, %v248
    %v255 = vpack.c.bf16 %v250, %v250
    %v256 = vld [vmem:[#allocation2] sm:$0xff]
    %v257 = vld [vmem:[#allocation2 + $0x8] sm:$0xff]
    %v258 = vmul.f32 %v256, %v256
    %v259 = vmul.f32 %v257, %v257
    %v260 = vsel %vm226, %v258, 0.0
    %261 = vadd.xlane.f32.xlu0 %v260
    %v262 = vpop.xlane.xlu0 %261
    %v263 = vsel %vm226, %v259, 0.0
    %264 = vadd.xlane.f32.xlu0 %v263
    %v265 = vpop.xlane.xlu0 %264
    %v266 = vrcp.pop 32.0
    %v267 = vmul.f32 32.0, %v266
    %v268 = vsub.f32 1.0, %v267
    %v269 = vmul.f32 %v266, %v268
    %v270 = vadd.f32 %v266, %v269
    %vm271 = vweird.f32 %v266
    %v272 = vsel %vm271, %v266, %v270
    %v273 = vmul.f32 %v262, %v272
    %v274 = vmul.f32 %v265, %v272
    %v275 = vadd.f32 %v273, 1e-06
    %v276 = vadd.f32 %v274, 1e-06
    %v277 = vrsqrt.pop %v275
    %v278 = vmul.f32 %v277, %v275
    %v279 = vmul.f32 %v278, %v277
    %v280 = vmul.f32 0.5, %v279
    %v281 = vsub.f32 1.5, %v280
    %v282 = vmul.f32 %v277, %v281
    %vm283 = vweird.f32 %v275
    %vm284 = vweird.f32 %v277
    %vm285 = vmor %vm283, %vm284
    %v286 = vsel %vm285, %v277, %v282
    %v287 = vrsqrt.pop %v276
    %v288 = vmul.f32 %v287, %v276
    %v289 = vmul.f32 %v288, %v287
    %v290 = vmul.f32 0.5, %v289
    %v291 = vsub.f32 1.5, %v290
    %v292 = vmul.f32 %v287, %v291
    %vm293 = vweird.f32 %v276
    %vm294 = vweird.f32 %v287
    %vm295 = vmor %vm293, %vm294
    %v296 = vsel %vm295, %v287, %v292
    %v297 = vmul.f32 %v256, %v286
    %v298 = vmul.f32 %v257, %v296
    %v299 = vperm.slane %v42, 0
    %v300 = vmul.f32 %v297, %v299
    %v301 = vmul.f32 %v298, %v299
    %v302 = vpack.c.bf16 %v301, %v300
    %v306 = vsel %vm226, %v302, 0
    %308 = vmatpush.bf16.msra.mxu0 0
    %309 = vmatpush.bf16.msra.mxu0 0
    %310 = vmatpush.bf16.msra.mxu0 0
    %311 = vmatpush.bf16.msra.mxu0 0
    %312 = vmatpush.bf16.msra.mxu0 0
    %313 = vmatpush.bf16.msra.mxu0 0
    %314 = vmatpush.bf16.msra.mxu0 %v211
    %315 = vmatpush.bf16.msra.mxu0 %v209
    %316 = vmatmul.bf16.gmra.mxu0 %v306
    %v317 = vpop.f32.mrf.mxu0
    %v318 = vadd.f32 0.0, %v317
    %v319 = vpop.f32.mrf.mxu0
    %v320 = vadd.f32 0.0, %v319
    %321 = vdwg.mxu0
    %v322 = vpack.c.bf16 %v318, %v318
    %v323 = vpack.c.bf16 %v320, %v320
    %v326 = vunpack.c.l.b16 %v252
    %v327 = vunpack.c.l.b16 %v253
    %v328 = vpack.c.b16 %v327, %v326
    %vm329 = vcmask 130048
    %v331 = vsel %vm329, %v322, 0
    %v334 = vsel %vm329, %v328, 0
    %336 = vmatpush.bf16.xpose.msra.mxu0 0
    %337 = vmatpush.bf16.xpose.msra.mxu0 0
    %338 = vmatpush.bf16.xpose.msra.mxu0 0
    %339 = vmatpush.bf16.xpose.msra.mxu0 0
    %340 = vmatpush.bf16.xpose.msra.mxu0 0
    %341 = vmatpush.bf16.xpose.msra.mxu0 0
    %342 = vmatpush.bf16.xpose.msra.mxu0 0
    %343 = vmatpush.bf16.xpose.msra.mxu0 %v334
    %344 = vmatmul.bf16.gmra.mxu0 %v331
    %v345 = vpop.f32.mrf.mxu0
    %v346 = vadd.f32 0.0, %v345
    %v347 = vpop.f32.mrf.mxu0
    %348 = vdwg.mxu0
    %v351 = vunpack.c.l.b16 %v254
    %v352 = vunpack.c.l.b16 %v255
    %v353 = vpack.c.b16 %v352, %v351
    %v355 = vsel %vm329, %v323, 0
    %v358 = vsel %vm329, %v353, 0
    %360 = vmatpush.bf16.xpose.msra.mxu0 0
    %361 = vmatpush.bf16.xpose.msra.mxu0 0
    %362 = vmatpush.bf16.xpose.msra.mxu0 0
    %363 = vmatpush.bf16.xpose.msra.mxu0 0
    %364 = vmatpush.bf16.xpose.msra.mxu0 0
    %365 = vmatpush.bf16.xpose.msra.mxu0 0
    %366 = vmatpush.bf16.xpose.msra.mxu0 0
    %367 = vmatpush.bf16.xpose.msra.mxu0 %v358
    %368 = vmatmul.bf16.gmra.mxu0 %v355
    %v369 = vpop.f32.mrf.mxu0
    %v370 = vadd.f32 0.0, %v369
    %v371 = vpop.f32.mrf.mxu0
    %372 = vdwg.mxu0
    %v374 = vunpack.c.l.b16 %v322
    %v375 = vpack.c.b16 %v374, %v374
    %376 = vrot.lane.b32.xlu0 %v375, 112
    %v377 = vpop.permute.xlu0 %376
    %378 = vrot.lane.b32.xlu0 %v328, 112
    %v379 = vpop.permute.xlu0 %378
    %v381 = vsel %vm329, %v377, 0
    %v384 = vsel %vm329, %v379, 0
    %386 = vmatpush.bf16.xpose.msra.mxu0 0
    %387 = vmatpush.bf16.xpose.msra.mxu0 0
    %388 = vmatpush.bf16.xpose.msra.mxu0 0
    %389 = vmatpush.bf16.xpose.msra.mxu0 0
    %390 = vmatpush.bf16.xpose.msra.mxu0 0
    %391 = vmatpush.bf16.xpose.msra.mxu0 0
    %392 = vmatpush.bf16.xpose.msra.mxu0 0
    %393 = vmatpush.bf16.xpose.msra.mxu0 %v384
    %394 = vmatmul.bf16.gmra.mxu0 %v381
    %v395 = vpop.f32.mrf.mxu0
    %v396 = vadd.f32 0.0, %v395
    %v397 = vpop.f32.mrf.mxu0
    %398 = vdwg.mxu0
    %v400 = vunpack.c.l.b16 %v323
    %v401 = vpack.c.b16 %v400, %v400
    %402 = vrot.lane.b32.xlu0 %v401, 112
    %v403 = vpop.permute.xlu0 %402
    %404 = vrot.lane.b32.xlu0 %v353, 112
    %v405 = vpop.permute.xlu0 %404
    %v407 = vsel %vm329, %v403, 0
    %v410 = vsel %vm329, %v405, 0
    %412 = vmatpush.bf16.xpose.msra.mxu0 0
    %413 = vmatpush.bf16.xpose.msra.mxu0 0
    %414 = vmatpush.bf16.xpose.msra.mxu0 0
    %415 = vmatpush.bf16.xpose.msra.mxu0 0
    %416 = vmatpush.bf16.xpose.msra.mxu0 0
    %417 = vmatpush.bf16.xpose.msra.mxu0 0
    %418 = vmatpush.bf16.xpose.msra.mxu0 0
    %419 = vmatpush.bf16.xpose.msra.mxu0 %v410
    %420 = vmatmul.bf16.gmra.mxu0 %v407
    %v421 = vpop.f32.mrf.mxu0
    %v422 = vadd.f32 0.0, %v421
    %v423 = vpop.f32.mrf.mxu0
    %424 = vdwg.mxu0
    %v425 = vsel %vm329, %v346, -inf
    %426 = vmax.xlane.f32.xlu0 %v425
    %v427 = vpop.xlane.xlu0 %426
    %v428 = vsel %vm329, %v370, -inf
    %429 = vmax.xlane.f32.xlu0 %v428
    %v430 = vpop.xlane.xlu0 %429
    %v431 = vsel %vm329, %v396, -inf
    %432 = vmax.xlane.f32.xlu0 %v431
    %v433 = vpop.xlane.xlu0 %432
    %v434 = vsel %vm329, %v422, -inf
    %435 = vmax.xlane.f32.xlu0 %v434
    %v436 = vpop.xlane.xlu0 %435
    %v437 = vsub.f32 %v346, %v427
    %v438 = vsub.f32 %v370, %v430
    %v439 = vsub.f32 %v396, %v433
    %v440 = vsub.f32 %v422, %v436
    %v441 = vmul.f32 %v437, 1.442695
    %v442 = vpow.pop %v441
    %v443 = vmul.f32 %v438, 1.442695
    %v444 = vpow.pop %v443
    %v445 = vmul.f32 %v439, 1.442695
    %v446 = vpow.pop %v445
    %v447 = vmul.f32 %v440, 1.442695
    %v448 = vpow.pop %v447
    %v449 = vsel %vm329, %v442, 0.0
    %450 = vadd.xlane.f32.xlu0 %v449
    %v451 = vpop.xlane.xlu0 %450
    %v452 = vsel %vm329, %v444, 0.0
    %453 = vadd.xlane.f32.xlu0 %v452
    %v454 = vpop.xlane.xlu0 %453
    %v455 = vsel %vm329, %v446, 0.0
    %456 = vadd.xlane.f32.xlu0 %v455
    %v457 = vpop.xlane.xlu0 %456
    %v458 = vsel %vm329, %v448, 0.0
    %459 = vadd.xlane.f32.xlu0 %v458
    %v460 = vpop.xlane.xlu0 %459
    %v461 = vrcp.pop %v451
    %v462 = vrcp.pop %v454
    %v463 = vrcp.pop %v457
    %v464 = vrcp.pop %v460
    %v465 = vmul.f32 %v442, %v461
    %v466 = vmul.f32 %v444, %v462
    %v467 = vmul.f32 %v446, %v463
    %v468 = vmul.f32 %v448, %v464
    %v469 = vpack.c.bf16 %v465, %v465
    %v470 = vpack.c.bf16 %v466, %v466
    %v471 = vpack.c.bf16 %v467, %v467
    %v472 = vpack.c.bf16 %v468, %v468
    %473 = vrot.lane.b32.xlu0 %v328, 96
    %v474 = vpop.permute.xlu0 %473
    %v477 = vsel %vm329, %v469, 0
    %479 = vmatpush.bf16.msra.mxu0 0
    %480 = vmatpush.bf16.msra.mxu0 0
    %481 = vmatpush.bf16.msra.mxu0 0
    %482 = vmatpush.bf16.msra.mxu0 0
    %483 = vmatpush.bf16.msra.mxu0 0
    %484 = vmatpush.bf16.msra.mxu0 0
    %485 = vmatpush.bf16.msra.mxu0 0
    %486 = vmatpush.bf16.msra.mxu0 %v474
    %487 = vmatmul.bf16.gmra.mxu0 %v477
    %v488 = vpop.f32.mrf.mxu0
    %v489 = vadd.f32 0.0, %v488
    %v490 = vpop.f32.mrf.mxu0
    %491 = vdwg.mxu0
    %492 = vrot.lane.b32.xlu0 %v353, 96
    %v493 = vpop.permute.xlu0 %492
    %v496 = vsel %vm329, %v470, 0
    %498 = vmatpush.bf16.msra.mxu0 0
    %499 = vmatpush.bf16.msra.mxu0 0
    %500 = vmatpush.bf16.msra.mxu0 0
    %501 = vmatpush.bf16.msra.mxu0 0
    %502 = vmatpush.bf16.msra.mxu0 0
    %503 = vmatpush.bf16.msra.mxu0 0
    %504 = vmatpush.bf16.msra.mxu0 0
    %505 = vmatpush.bf16.msra.mxu0 %v493
    %506 = vmatmul.bf16.gmra.mxu0 %v496
    %v507 = vpop.f32.mrf.mxu0
    %v508 = vadd.f32 0.0, %v507
    %v509 = vpop.f32.mrf.mxu0
    %510 = vdwg.mxu0
    %v511 = vpack.c.bf16 %v508, %v489
    %512 = vrot.lane.b32.xlu0 %v328, 80
    %v513 = vpop.permute.xlu0 %512
    %v516 = vsel %vm329, %v471, 0
    %518 = vmatpush.bf16.msra.mxu0 0
    %519 = vmatpush.bf16.msra.mxu0 0
    %520 = vmatpush.bf16.msra.mxu0 0
    %521 = vmatpush.bf16.msra.mxu0 0
    %522 = vmatpush.bf16.msra.mxu0 0
    %523 = vmatpush.bf16.msra.mxu0 0
    %524 = vmatpush.bf16.msra.mxu0 0
    %525 = vmatpush.bf16.msra.mxu0 %v513
    %526 = vmatmul.bf16.gmra.mxu0 %v516
    %v527 = vpop.f32.mrf.mxu0
    %v528 = vadd.f32 0.0, %v527
    %v529 = vpop.f32.mrf.mxu0
    %530 = vdwg.mxu0
    %531 = vrot.lane.b32.xlu0 %v353, 80
    %v532 = vpop.permute.xlu0 %531
    %v535 = vsel %vm329, %v472, 0
    %537 = vmatpush.bf16.msra.mxu0 0
    %538 = vmatpush.bf16.msra.mxu0 0
    %539 = vmatpush.bf16.msra.mxu0 0
    %540 = vmatpush.bf16.msra.mxu0 0
    %541 = vmatpush.bf16.msra.mxu0 0
    %542 = vmatpush.bf16.msra.mxu0 0
    %543 = vmatpush.bf16.msra.mxu0 0
    %544 = vmatpush.bf16.msra.mxu0 %v532
    %545 = vmatmul.bf16.gmra.mxu0 %v535
    %v546 = vpop.f32.mrf.mxu0
    %v547 = vadd.f32 0.0, %v546
    %v548 = vpop.f32.mrf.mxu0
    %549 = vdwg.mxu0
    %v550 = vpack.c.bf16 %v547, %v528
    %v553 = vunpack.c.l.b16 %v52
    %v554 = vunpack.c.l.b16 %v53
    %v555 = vpack.c.b16 %v554, %v553
    %v558 = vsel %vm329, %v550, 0
    %560 = vmatpush.bf16.msra.mxu0 0
    %561 = vmatpush.bf16.msra.mxu0 0
    %562 = vmatpush.bf16.msra.mxu0 0
    %563 = vmatpush.bf16.msra.mxu0 0
    %564 = vmatpush.bf16.msra.mxu0 0
    %565 = vmatpush.bf16.msra.mxu0 0
    %566 = vmatpush.bf16.msra.mxu0 0
    %567 = vmatpush.bf16.msra.mxu0 %v555
    %568 = vmatmul.bf16.gmra.mxu0 %v558
    %v569 = vpop.f32.mrf.mxu0
    %v570 = vadd.f32 0.0, %v569
    %v571 = vpop.f32.mrf.mxu0
    %v572 = vadd.f32 0.0, %v571
    %573 = vdwg.mxu0
    %v576 = vunpack.c.l.b16 %v50
    %v577 = vunpack.c.l.b16 %v51
    %v578 = vpack.c.b16 %v577, %v576
    %v581 = vsel %vm329, %v511, 0
    %583 = vmatpush.bf16.msra.mxu0 0
    %584 = vmatpush.bf16.msra.mxu0 0
    %585 = vmatpush.bf16.msra.mxu0 0
    %586 = vmatpush.bf16.msra.mxu0 0
    %587 = vmatpush.bf16.msra.mxu0 0
    %588 = vmatpush.bf16.msra.mxu0 0
    %589 = vmatpush.bf16.msra.mxu0 0
    %590 = vmatpush.bf16.msra.mxu0 %v578
    %591 = vmatmul.bf16.gmra.mxu0 %v581
    %v592 = vpop.f32.mrf.mxu0
    %v593 = vadd.f32 %v570, %v592
    %v594 = vpop.f32.mrf.mxu0
    %v595 = vadd.f32 %v572, %v594
    %596 = vdwg.mxu0
    %v597 = vperm.slane %v43, 0
    %v598 = vadd.f32 %v593, %v597
    %v599 = vadd.f32 %v595, %v597
    %v600 = vadd.f32 %v598, %v256
    %v601 = vadd.f32 %v599, %v257
    %v602 = vmul.f32 %v600, %v600
    %v603 = vmul.f32 %v601, %v601
    %v604 = vsel %vm226, %v602, 0.0
    %605 = vadd.xlane.f32.xlu0 %v604
    %v606 = vpop.xlane.xlu0 %605
    %v607 = vsel %vm226, %v603, 0.0
    %608 = vadd.xlane.f32.xlu0 %v607
    %v609 = vpop.xlane.xlu0 %608
    %v610 = vmul.f32 %v606, %v272
    %v611 = vmul.f32 %v609, %v272
    %v612 = vadd.f32 %v610, 1e-06
    %v613 = vadd.f32 %v611, 1e-06
    %v614 = vrsqrt.pop %v612
    %v615 = vmul.f32 %v614, %v612
    %v616 = vmul.f32 %v615, %v614
    %v617 = vmul.f32 0.5, %v616
    %v618 = vsub.f32 1.5, %v617
    %v619 = vmul.f32 %v614, %v618
    %vm620 = vweird.f32 %v612
    %vm621 = vweird.f32 %v614
    %vm622 = vmor %vm620, %vm621
    %v623 = vsel %vm622, %v614, %v619
    %v624 = vrsqrt.pop %v613
    %v625 = vmul.f32 %v624, %v613
    %v626 = vmul.f32 %v625, %v624
    %v627 = vmul.f32 0.5, %v626
    %v628 = vsub.f32 1.5, %v627
    %v629 = vmul.f32 %v624, %v628
    %vm630 = vweird.f32 %v613
    %vm631 = vweird.f32 %v624
    %vm632 = vmor %vm630, %vm631
    %v633 = vsel %vm632, %v624, %v629
    %v634 = vmul.f32 %v600, %v623
    %v635 = vmul.f32 %v601, %v633
    %v636 = vperm.slane %v44, 0
    %v637 = vmul.f32 %v634, %v636
    %v638 = vmul.f32 %v635, %v636
    %v639 = vpack.c.bf16 %v638, %v637
    %640 = vrot.lane.b32.xlu0 %v209, 96
    %v641 = vpop.permute.xlu0 %640
    %642 = vrot.lane.b32.xlu0 %v211, 96
    %v643 = vpop.permute.xlu0 %642
    %v647 = vsel %vm226, %v639, 0
    %649 = vmatpush.bf16.msra.mxu0 0
    %650 = vmatpush.bf16.msra.mxu0 0
    %651 = vmatpush.bf16.msra.mxu0 0
    %652 = vmatpush.bf16.msra.mxu0 0
    %653 = vmatpush.bf16.msra.mxu0 0
    %654 = vmatpush.bf16.msra.mxu0 0
    %655 = vmatpush.bf16.msra.mxu0 %v643
    %656 = vmatpush.bf16.msra.mxu0 %v641
    %657 = vmatmul.bf16.gmra.mxu0 %v647
    %v658 = vpop.f32.mrf.mxu0
    %v659 = vadd.f32 0.0, %v658
    %v660 = vpop.f32.mrf.mxu0
    %v661 = vadd.f32 0.0, %v660
    %662 = vdwg.mxu0
    %v663 = vpack.c.bf16 %v659, %v659
    %v664 = vpack.c.bf16 %v661, %v661
    %665 = vrot.lane.b32.xlu0 %v328, 64
    %v666 = vpop.permute.xlu0 %665
    %v668 = vsel %vm329, %v663, 0
    %v671 = vsel %vm329, %v666, 0
    %673 = vmatpush.bf16.xpose.msra.mxu0 0
    %674 = vmatpush.bf16.xpose.msra.mxu0 0
    %675 = vmatpush.bf16.xpose.msra.mxu0 0
    %676 = vmatpush.bf16.xpose.msra.mxu0 0
    %677 = vmatpush.bf16.xpose.msra.mxu0 0
    %678 = vmatpush.bf16.xpose.msra.mxu0 0
    %679 = vmatpush.bf16.xpose.msra.mxu0 0
    %680 = vmatpush.bf16.xpose.msra.mxu0 %v671
    %681 = vmatmul.bf16.gmra.mxu0 %v668
    %v682 = vpop.f32.mrf.mxu0
    %v683 = vadd.f32 0.0, %v682
    %v684 = vpop.f32.mrf.mxu0
    %685 = vdwg.mxu0
    %686 = vrot.lane.b32.xlu0 %v353, 64
    %v687 = vpop.permute.xlu0 %686
    %v689 = vsel %vm329, %v664, 0
    %v692 = vsel %vm329, %v687, 0
    %694 = vmatpush.bf16.xpose.msra.mxu0 0
    %695 = vmatpush.bf16.xpose.msra.mxu0 0
    %696 = vmatpush.bf16.xpose.msra.mxu0 0
    %697 = vmatpush.bf16.xpose.msra.mxu0 0
    %698 = vmatpush.bf16.xpose.msra.mxu0 0
    %699 = vmatpush.bf16.xpose.msra.mxu0 0
    %700 = vmatpush.bf16.xpose.msra.mxu0 0
    %701 = vmatpush.bf16.xpose.msra.mxu0 %v692
    %702 = vmatmul.bf16.gmra.mxu0 %v689
    %v703 = vpop.f32.mrf.mxu0
    %v704 = vadd.f32 0.0, %v703
    %v705 = vpop.f32.mrf.mxu0
    %706 = vdwg.mxu0
    %v708 = vunpack.c.l.b16 %v663
    %v709 = vpack.c.b16 %v708, %v708
    %710 = vrot.lane.b32.xlu0 %v709, 112
    %v711 = vpop.permute.xlu0 %710
    %712 = vrot.lane.b32.xlu0 %v328, 48
    %v713 = vpop.permute.xlu0 %712
    %v715 = vsel %vm329, %v711, 0
    %v718 = vsel %vm329, %v713, 0
    %720 = vmatpush.bf16.xpose.msra.mxu0 0
    %721 = vmatpush.bf16.xpose.msra.mxu0 0
    %722 = vmatpush.bf16.xpose.msra.mxu0 0
    %723 = vmatpush.bf16.xpose.msra.mxu0 0
    %724 = vmatpush.bf16.xpose.msra.mxu0 0
    %725 = vmatpush.bf16.xpose.msra.mxu0 0
    %726 = vmatpush.bf16.xpose.msra.mxu0 0
    %727 = vmatpush.bf16.xpose.msra.mxu0 %v718
    %728 = vmatmul.bf16.gmra.mxu0 %v715
    %v729 = vpop.f32.mrf.mxu0
    %v730 = vadd.f32 0.0, %v729
    %v731 = vpop.f32.mrf.mxu0
    %732 = vdwg.mxu0
    %v734 = vunpack.c.l.b16 %v664
    %v735 = vpack.c.b16 %v734, %v734
    %736 = vrot.lane.b32.xlu0 %v735, 112
    %v737 = vpop.permute.xlu0 %736
    %738 = vrot.lane.b32.xlu0 %v353, 48
    %v739 = vpop.permute.xlu0 %738
    %v741 = vsel %vm329, %v737, 0
    %v744 = vsel %vm329, %v739, 0
    %746 = vmatpush.bf16.xpose.msra.mxu0 0
    %747 = vmatpush.bf16.xpose.msra.mxu0 0
    %748 = vmatpush.bf16.xpose.msra.mxu0 0
    %749 = vmatpush.bf16.xpose.msra.mxu0 0
    %750 = vmatpush.bf16.xpose.msra.mxu0 0
    %751 = vmatpush.bf16.xpose.msra.mxu0 0
    %752 = vmatpush.bf16.xpose.msra.mxu0 0
    %753 = vmatpush.bf16.xpose.msra.mxu0 %v744
    %754 = vmatmul.bf16.gmra.mxu0 %v741
    %v755 = vpop.f32.mrf.mxu0
    %v756 = vadd.f32 0.0, %v755
    %v757 = vpop.f32.mrf.mxu0
    %758 = vdwg.mxu0
    %v759 = vsel %vm329, %v683, -inf
    %760 = vmax.xlane.f32.xlu0 %v759
    %v761 = vpop.xlane.xlu0 %760
    %v762 = vsel %vm329, %v704, -inf
    %763 = vmax.xlane.f32.xlu0 %v762
    %v764 = vpop.xlane.xlu0 %763
    %v765 = vsel %vm329, %v730, -inf
    %766 = vmax.xlane.f32.xlu0 %v765
    %v767 = vpop.xlane.xlu0 %766
    %v768 = vsel %vm329, %v756, -inf
    %769 = vmax.xlane.f32.xlu0 %v768
    %v770 = vpop.xlane.xlu0 %769
    %v771 = vsub.f32 %v683, %v761
    %v772 = vsub.f32 %v704, %v764
    %v773 = vsub.f32 %v730, %v767
    %v774 = vsub.f32 %v756, %v770
    %v775 = vmul.f32 %v771, 1.442695
    %v776 = vpow.pop %v775
    %v777 = vmul.f32 %v772, 1.442695
    %v778 = vpow.pop %v777
    %v779 = vmul.f32 %v773, 1.442695
    %v780 = vpow.pop %v779
    %v781 = vmul.f32 %v774, 1.442695
    %v782 = vpow.pop %v781
    %v783 = vsel %vm329, %v776, 0.0
    %784 = vadd.xlane.f32.xlu0 %v783
    %v785 = vpop.xlane.xlu0 %784
    %v786 = vsel %vm329, %v778, 0.0
    %787 = vadd.xlane.f32.xlu0 %v786
    %v788 = vpop.xlane.xlu0 %787
    %v789 = vsel %vm329, %v780, 0.0
    %790 = vadd.xlane.f32.xlu0 %v789
    %v791 = vpop.xlane.xlu0 %790
    %v792 = vsel %vm329, %v782, 0.0
    %793 = vadd.xlane.f32.xlu0 %v792
    %v794 = vpop.xlane.xlu0 %793
    %v795 = vrcp.pop %v785
    %v796 = vrcp.pop %v788
    %v797 = vrcp.pop %v791
    %v798 = vrcp.pop %v794
    %v799 = vmul.f32 %v776, %v795
    %v800 = vmul.f32 %v778, %v796
    %v801 = vmul.f32 %v780, %v797
    %v802 = vmul.f32 %v782, %v798
    %v803 = vpack.c.bf16 %v799, %v799
    %v804 = vpack.c.bf16 %v800, %v800
    %v805 = vpack.c.bf16 %v801, %v801
    %v806 = vpack.c.bf16 %v802, %v802
    %807 = vrot.lane.b32.xlu0 %v328, 32
    %v808 = vpop.permute.xlu0 %807
    %v811 = vsel %vm329, %v803, 0
    %813 = vmatpush.bf16.msra.mxu0 0
    %814 = vmatpush.bf16.msra.mxu0 0
    %815 = vmatpush.bf16.msra.mxu0 0
    %816 = vmatpush.bf16.msra.mxu0 0
    %817 = vmatpush.bf16.msra.mxu0 0
    %818 = vmatpush.bf16.msra.mxu0 0
    %819 = vmatpush.bf16.msra.mxu0 0
    %820 = vmatpush.bf16.msra.mxu0 %v808
    %821 = vmatmul.bf16.gmra.mxu0 %v811
    %v822 = vpop.f32.mrf.mxu0
    %v823 = vadd.f32 0.0, %v822
    %v824 = vpop.f32.mrf.mxu0
    %825 = vdwg.mxu0
    %826 = vrot.lane.b32.xlu0 %v353, 32
    %v827 = vpop.permute.xlu0 %826
    %v830 = vsel %vm329, %v804, 0
    %832 = vmatpush.bf16.msra.mxu0 0
    %833 = vmatpush.bf16.msra.mxu0 0
    %834 = vmatpush.bf16.msra.mxu0 0
    %835 = vmatpush.bf16.msra.mxu0 0
    %836 = vmatpush.bf16.msra.mxu0 0
    %837 = vmatpush.bf16.msra.mxu0 0
    %838 = vmatpush.bf16.msra.mxu0 0
    %839 = vmatpush.bf16.msra.mxu0 %v827
    %840 = vmatmul.bf16.gmra.mxu0 %v830
    %v841 = vpop.f32.mrf.mxu0
    %v842 = vadd.f32 0.0, %v841
    %v843 = vpop.f32.mrf.mxu0
    %844 = vdwg.mxu0
    %v845 = vpack.c.bf16 %v842, %v823
    %846 = vrot.lane.b32.xlu0 %v328, 16
    %v847 = vpop.permute.xlu0 %846
    %v850 = vsel %vm329, %v805, 0
    %852 = vmatpush.bf16.msra.mxu0 0
    %853 = vmatpush.bf16.msra.mxu0 0
    %854 = vmatpush.bf16.msra.mxu0 0
    %855 = vmatpush.bf16.msra.mxu0 0
    %856 = vmatpush.bf16.msra.mxu0 0
    %857 = vmatpush.bf16.msra.mxu0 0
    %858 = vmatpush.bf16.msra.mxu0 0
    %859 = vmatpush.bf16.msra.mxu0 %v847
    %860 = vmatmul.bf16.gmra.mxu0 %v850
    %v861 = vpop.f32.mrf.mxu0
    %v862 = vadd.f32 0.0, %v861
    %v863 = vpop.f32.mrf.mxu0
    %864 = vdwg.mxu0
    %865 = vrot.lane.b32.xlu0 %v353, 16
    %v866 = vpop.permute.xlu0 %865
    %v869 = vsel %vm329, %v806, 0
    %871 = vmatpush.bf16.msra.mxu0 0
    %872 = vmatpush.bf16.msra.mxu0 0
    %873 = vmatpush.bf16.msra.mxu0 0
    %874 = vmatpush.bf16.msra.mxu0 0
    %875 = vmatpush.bf16.msra.mxu0 0
    %876 = vmatpush.bf16.msra.mxu0 0
    %877 = vmatpush.bf16.msra.mxu0 0
    %878 = vmatpush.bf16.msra.mxu0 %v866
    %879 = vmatmul.bf16.gmra.mxu0 %v869
    %v880 = vpop.f32.mrf.mxu0
    %v881 = vadd.f32 0.0, %v880
    %v882 = vpop.f32.mrf.mxu0
    %883 = vdwg.mxu0
    %v884 = vpack.c.bf16 %v881, %v862
    %v887 = vunpack.c.l.b16 %v56
    %v888 = vunpack.c.l.b16 %v57
    %v889 = vpack.c.b16 %v888, %v887
    %v892 = vsel %vm329, %v884, 0
    %894 = vmatpush.bf16.msra.mxu0 0
    %895 = vmatpush.bf16.msra.mxu0 0
    %896 = vmatpush.bf16.msra.mxu0 0
    %897 = vmatpush.bf16.msra.mxu0 0
    %898 = vmatpush.bf16.msra.mxu0 0
    %899 = vmatpush.bf16.msra.mxu0 0
    %900 = vmatpush.bf16.msra.mxu0 0
    %901 = vmatpush.bf16.msra.mxu0 %v889
    %902 = vmatmul.bf16.gmra.mxu0 %v892
    %v903 = vpop.f32.mrf.mxu0
    %v904 = vadd.f32 0.0, %v903
    %v905 = vpop.f32.mrf.mxu0
    %v906 = vadd.f32 0.0, %v905
    %907 = vdwg.mxu0
    %v910 = vunpack.c.l.b16 %v54
    %v911 = vunpack.c.l.b16 %v55
    %v912 = vpack.c.b16 %v911, %v910
    %v915 = vsel %vm329, %v845, 0
    %917 = vmatpush.bf16.msra.mxu0 0
    %918 = vmatpush.bf16.msra.mxu0 0
    %919 = vmatpush.bf16.msra.mxu0 0
    %920 = vmatpush.bf16.msra.mxu0 0
    %921 = vmatpush.bf16.msra.mxu0 0
    %922 = vmatpush.bf16.msra.mxu0 0
    %923 = vmatpush.bf16.msra.mxu0 0
    %924 = vmatpush.bf16.msra.mxu0 %v912
    %925 = vmatmul.bf16.gmra.mxu0 %v915
    %v926 = vpop.f32.mrf.mxu0
    %v927 = vadd.f32 %v904, %v926
    %v928 = vpop.f32.mrf.mxu0
    %v929 = vadd.f32 %v906, %v928
    %930 = vdwg.mxu0
    %v931 = vperm.slane %v45, 0
    %v932 = vadd.f32 %v927, %v931
    %v933 = vadd.f32 %v929, %v931
    %v934 = vadd.f32 %v932, %v600
    %v935 = vadd.f32 %v933, %v601
    %936 = vst.msk [vmem:[#allocation5] sm:$0xff] %vm226, %v934
    %937 = vst.msk [vmem:[#allocation5 + $0x8] sm:$0xff] %vm226, %v935
    // Predicated region
    $region30: #{tpu_custom_call.1} parent=1 // pred_check
      _
    $region31: #{tpu_custom_call.1} parent=1 // pred_check_branch
      %939 = sbr.rel (0) target = $region33
    $region32: #{tpu_custom_call.1} parent=1 // pred_region
      %941 = vsyncadd [#allocation4], 0
      %s942 = sshll.u32 [#allocation5], 4
      %s943 = int_to_ptr.vmem [resolvable:$true] %s942
      %s944 = sshll.u32 %s6, 4
      %s945 = int_to_ptr.hbm [resolvable:$true] %s944
      %950 = dma.vmem_to_hbm [thread:$0]  %s943, 256, %s945, [#allocation4], 128, 128, 8
    $region33: #{tpu_custom_call.1} parent=1 // pred_fallthru
      _
    // Predicated region
    $region34: #{tpu_custom_call.1} parent=1 // pred_check
      _
    $region35: #{tpu_custom_call.1} parent=1 // pred_check_branch
      %952 = sbr.rel (0) target = $region37
    $region36: #{tpu_custom_call.1} parent=1 // pred_region
      %954 = dma.done [#allocation4], 256
    $region37: #{tpu_custom_call.1} parent=1 // pred_fallthru
      _
    %955 = vsyncpa [#allocation3], 1
    %956 = vsyncpa [#allocation4], 1

</llo_original>
